<compile_context>
chip_gen: v5e
topology: v5e:2x2
jax: 0.10.0
libtpu: 0.0.40
codegen_flags: <defaults>
</compile_context>

<pallas_src>
import functools

import numpy as np
import jax
import jax.numpy as jnp
from jax.experimental import pallas as pl
from jax.experimental.pallas import tpu as pltpu


# ---------------------------------------------------------------------------
# Kernels
# ---------------------------------------------------------------------------

def _ca_block_kernel(x_ref, p_ref, mscale_ref, w1_ref, shift_ref,
                     wh_ref, ww_ref, eh_ref, ew_ref, o_ref):
    """Single-pass kernel: one batch element, full (C, H*W) tile per step."""
    H = eh_ref.shape[0]
    x = x_ref[0]                                                      # (C, HW), native dtype

    # Fused coordinate pooling (mean over W | mean over H) as ONE matmul against
    # the constant 0/1 matrix; 1/W, 1/H mean scales applied post-matmul in f32.
    pooled = jnp.dot(x, p_ref[...], preferred_element_type=jnp.float32)      # (C, H+W)
    pooled = pooled * mscale_ref[...]

    # conv_1 (1x1) + eval-mode BN (scale folded into weight, shift as bias) + ReLU,
    # once on the fused slab (no activation concat/split relayout).
    z = jnp.maximum(
        jnp.dot(w1_ref[...], pooled, preferred_element_type=jnp.float32)
        + shift_ref[...], 0.0)                                                # (Cr, H+W)

    # F_h / F_w (1x1, C//r -> C) + sigmoid gates on the tiny split halves.
    s_h = jax.nn.sigmoid(
        jnp.dot(wh_ref[...], z[:, :H], preferred_element_type=jnp.float32))  # (C, H)
    s_w = jax.nn.sigmoid(
        jnp.dot(ww_ref[...], z[:, H:], preferred_element_type=jnp.float32))  # (C, W)

    # Broadcast both gates back to the flat (C, HW) layout via 0/1 matmuls (MXU,
    # lane-dense, no XLU relayout) and apply; gate downcast once, x stays native.
    gate = (jnp.dot(s_h.astype(x.dtype), eh_ref[...],
                    preferred_element_type=jnp.float32) *
            jnp.dot(s_w.astype(x.dtype), ew_ref[...],
                    preferred_element_type=jnp.float32))                      # (C, HW)
    o_ref[0] = (x * gate.astype(x.dtype)).astype(o_ref.dtype)


def _ca_gates_kernel(x_ref, p_ref, mscale_ref, w1_ref, shift_ref, wh_ref, ww_ref,
                     sh_ref, sw_ref, acc_ref):
    """Two-pass path, pass 1: pooled accumulation over HW tiles -> gates."""
    t = pl.program_id(1)

    @pl.when(t == 0)
    def _():
        acc_ref[...] = jnp.zeros_like(acc_ref)

    acc_ref[...] += jnp.dot(x_ref[0], p_ref[...],
                            preferred_element_type=jnp.float32)              # (C, H+W)

    @pl.when(t == pl.num_programs(1) - 1)
    def _():
        H = sh_ref.shape[-1]
        pooled = acc_ref[...] * mscale_ref[...]                              # f32 means
        z = jnp.maximum(
            jnp.dot(w1_ref[...], pooled, preferred_element_type=jnp.float32)
            + shift_ref[...], 0.0)
        sh_ref[0] = jax.nn.sigmoid(
            jnp.dot(wh_ref[...], z[:, :H],
                    preferred_element_type=jnp.float32)).astype(sh_ref.dtype)
        sw_ref[0] = jax.nn.sigmoid(
            jnp.dot(ww_ref[...], z[:, H:],
                    preferred_element_type=jnp.float32)).astype(sw_ref.dtype)


def _ca_apply_kernel(x_ref, sh_ref, sw_ref, eh_ref, ew_ref, o_ref):
    """Two-pass path, pass 2: tiled elementwise apply of the gates."""
    x = x_ref[0]                                                             # (C, thw)
    gate = (jnp.dot(sh_ref[0], eh_ref[...], preferred_element_type=jnp.float32) *
            jnp.dot(sw_ref[0], ew_ref[...], preferred_element_type=jnp.float32))
    o_ref[0] = (x * gate.astype(x.dtype)).astype(o_ref.dtype)


# ---------------------------------------------------------------------------
# Helpers
# ---------------------------------------------------------------------------

def _as_2d_weight(w):
    w = jnp.asarray(w)
    if w.ndim == 4:  # PyTorch 1x1 conv weight (Cout, Cin, 1, 1)
        w = w.reshape(w.shape[0], w.shape[1])
    return w


@functools.lru_cache(maxsize=None)
def _coord_constants_np(H, W):
    """Pooling / broadcast 0/1 matrices for the flattened H*W axis (numpy, cached)."""
    HW = H * W
    idx = np.arange(HW)
    h_of = idx // W
    w_of = idx % W
    p = np.zeros((HW, H + W), np.float32)        # fused pooling: [mean-W | mean-H]
    p[idx, h_of] = 1.0
    p[idx, H + w_of] = 1.0
    e_h = np.zeros((H, HW), np.float32)          # broadcast s_h back over W
    e_h[h_of, idx] = 1.0
    e_w = np.zeros((W, HW), np.float32)          # broadcast s_w back over H
    e_w[w_of, idx] = 1.0
    mscale = np.concatenate([np.full(H, 1.0 / W, np.float32),
                             np.full(W, 1.0 / H, np.float32)]).reshape(1, H + W)
    return p, e_h, e_w, mscale


def _const_spec(shape):
    """BlockSpec for a grid-invariant operand; single-buffered when supported."""
    index_map = lambda *_: (0,) * len(shape)
    try:
        return pl.BlockSpec(shape, index_map, pipeline_mode=pl.Buffered(1))
    except Exception:   # pipeline_mode / Buffered unavailable -> default buffering
        return pl.BlockSpec(shape, index_map)


def _vmem_capacity_bytes():
    try:
        return int(pltpu.get_tpu_info().vmem_capacity_bytes)
    except Exception:
        return 64 << 20   # conservative (v7x per-TC)


def _vmem_limit(est_bytes, cap_bytes):
    return int(min(max(int(est_bytes) + (8 << 20), 32 << 20), int(0.9 * cap_bytes)))


def _single_pass_vmem_bytes(C, H, W, itemsize):
    HW = H * W
    tile = C * HW * itemsize
    consts = 2 * (H + W) * HW * itemsize       # P + e_h + e_w (single-buffered)
    f32_tmp = 3 * C * HW * 4                   # gate / pooled f32 intermediates
    return 4 * tile + consts + f32_tmp + (2 << 20)


def _pick_hw_tile(HW, C, H, W, itemsize, budget):
    """Largest multiple-of-128 divisor of HW whose two-pass working sets fit."""
    best = None
    for t in range(128, HW + 1, 128):
        if HW % t:
            continue
        est1 = (2 * C * t * itemsize + 2 * t * (H + W) * itemsize
                + 4 * C * (H + W) + 2 * C * (H + W) * itemsize + (2 << 20))
        est2 = (4 * C * t * itemsize + 2 * (H + W) * t * itemsize
                + 4 * C * (H + W) * itemsize + 3 * C * t * 4 + (2 << 20))
        if max(est1, est2) <= budget:
            best = t
    return best


# ---------------------------------------------------------------------------
# Wrapper
# ---------------------------------------------------------------------------

def ca_block(x, w1, wh, ww, bn_gamma, bn_beta, bn_mean, bn_var, eps=1e-5,
             force_two_pass=False, hw_tile=None):
    N, C, H, W = x.shape
    HW = H * W
    dt = x.dtype
    itemsize = dt.itemsize

    w1 = _as_2d_weight(w1).astype(jnp.float32)   # (Cr, C)
    wh = _as_2d_weight(wh).astype(jnp.float32)   # (C, Cr)
    ww = _as_2d_weight(ww).astype(jnp.float32)   # (C, Cr)
    Cr = w1.shape[0]

    # Fold eval-mode BatchNorm: scale into conv_1's weight, shift stays as bias.
    inv = 1.0 / jnp.sqrt(bn_var.astype(jnp.float32) + eps)
    scale = bn_gamma.astype(jnp.float32) * inv
    w1_scaled = scale[:, None] * w1                                    # (Cr, C)
    shift = (bn_beta.astype(jnp.float32)
             - bn_mean.astype(jnp.float32) * scale).reshape(Cr, 1)     # (Cr, 1)

    p_np, eh_np, ew_np, ms_np = _coord_constants_np(H, W)
    p_c = jnp.asarray(p_np, dtype=dt)     # exact 0/1 in the matmul input dtype
    e_h = jnp.asarray(eh_np, dtype=dt)
    e_w = jnp.asarray(ew_np, dtype=dt)
    mscale = jnp.asarray(ms_np)           # f32 mean scales, applied post-matmul

    x_flat = x.reshape(N, C, HW)          # lane-dense HBM-facing layout (free)

    cap = _vmem_capacity_bytes()
    budget = int(0.75 * cap)
    est_single = _single_pass_vmem_bytes(C, H, W, itemsize)
    two_pass = bool(force_two_pass) or est_single > budget

    thw = None
    if two_pass:
        thw = hw_tile if hw_tile is not None else _pick_hw_tile(HW, C, H, W,
                                                                itemsize, budget)
        if thw is None or thw <= 0 or HW % thw != 0 or thw % 128 != 0:
            # TODO(synk): ragged HW tiling for maps without a multiple-of-128 divisor.
            two_pass = False

    if not two_pass:
        out_flat = pl.pallas_call(
            _ca_block_kernel,
            out_shape=jax.ShapeDtypeStruct((N, C, HW), dt),
            grid_spec=pltpu.PrefetchScalarGridSpec(
                num_scalar_prefetch=0,
                grid=(N,),
                in_specs=[
                    pl.BlockSpec((1, C, HW), lambda i: (i, 0, 0)),   # x (lane-dense)
                    _const_spec((HW, H + W)),                        # fused pooling P
                    _const_spec((1, H + W)),                         # f32 mean scales
                    _const_spec((Cr, C)),                            # conv_1 (BN folded)
                    _const_spec((Cr, 1)),                            # BN shift (bias)
                    _const_spec((C, Cr)),                            # F_h weight
                    _const_spec((C, Cr)),                            # F_w weight
                    _const_spec((H, HW)),                            # expand s_h
                    _const_spec((W, HW)),                            # expand s_w
                ],
                out_specs=pl.BlockSpec((1, C, HW), lambda i: (i, 0, 0)),
            ),
            compiler_params=pltpu.CompilerParams(
                dimension_semantics=("parallel",),
                vmem_limit_bytes=_vmem_limit(est_single, cap),
            ),
        )(x_flat, p_c, mscale, w1_scaled, shift, wh, ww, e_h, e_w)
        return out_flat.reshape(N, C, H, W)

    # ------------------------- two-pass path (large C*HW) -------------------------
    nt = HW // thw

    est_p1 = (2 * C * thw * itemsize + 2 * thw * (H + W) * itemsize
              + 4 * C * (H + W) + 2 * C * (H + W) * itemsize + (2 << 20))
    s_h, s_w = pl.pallas_call(
        _ca_gates_kernel,
        out_shape=(jax.ShapeDtypeStruct((N, C, H), dt),
                   jax.ShapeDtypeStruct((N, C, W), dt)),
        grid_spec=pltpu.PrefetchScalarGridSpec(
            num_scalar_prefetch=0,
            grid=(N, nt),
            in_specs=[
                pl.BlockSpec((1, C, thw), lambda n, t: (n, 0, t)),   # x tile
                pl.BlockSpec((thw, H + W), lambda n, t: (t, 0)),     # P slice
                _const_spec((1, H + W)),                             # f32 mean scales
                _const_spec((Cr, C)),                                # conv_1 (BN folded)
                _const_spec((Cr, 1)),                                # BN shift
                _const_spec((C, Cr)),                                # F_h weight
                _const_spec((C, Cr)),                                # F_w weight
            ],
            out_specs=(pl.BlockSpec((1, C, H), lambda n, t: (n, 0, 0)),
                       pl.BlockSpec((1, C, W), lambda n, t: (n, 0, 0))),
            scratch_shapes=[pltpu.VMEM((C, H + W), jnp.float32)],
        ),
        compiler_params=pltpu.CompilerParams(
            dimension_semantics=("parallel", "arbitrary"),
            vmem_limit_bytes=_vmem_limit(est_p1, cap),
        ),
    )(x_flat, p_c, mscale, w1_scaled, shift, wh, ww)

    est_p2 = (4 * C * thw * itemsize + 2 * (H + W) * thw * itemsize
              + 4 * C * (H + W) * itemsize + 3 * C * thw * 4 + (2 << 20))
    out_flat = pl.pallas_call(
        _ca_apply_kernel,
        out_shape=jax.ShapeDtypeStruct((N, C, HW), dt),
        grid_spec=pltpu.PrefetchScalarGridSpec(
            num_scalar_prefetch=0,
            grid=(N, nt),
            in_specs=[
                pl.BlockSpec((1, C, thw), lambda n, t: (n, 0, t)),   # x tile
                pl.BlockSpec((1, C, H), lambda n, t: (n, 0, 0)),     # s_h gates
                pl.BlockSpec((1, C, W), lambda n, t: (n, 0, 0)),     # s_w gates
                pl.BlockSpec((H, thw), lambda n, t: (0, t)),         # expand s_h slice
                pl.BlockSpec((W, thw), lambda n, t: (0, t)),         # expand s_w slice
            ],
            out_specs=pl.BlockSpec((1, C, thw), lambda n, t: (n, 0, t)),
        ),
        compiler_params=pltpu.CompilerParams(
            dimension_semantics=("parallel", "parallel"),
            vmem_limit_bytes=_vmem_limit(est_p2, cap),
        ),
    )(x_flat, s_h, s_w, e_h, e_w)

    return out_flat.reshape(N, C, H, W)


# ---------------------------------------------------------------------------
# Pure-JAX reference (mirrors the PyTorch forward, eval-mode BN)
# ---------------------------------------------------------------------------

def ca_block_ref(x, w1, wh, ww, g, b, m, v, eps=1e-5):
    N, C, H, W = x.shape
    x_h = jnp.mean(x, axis=3)                        # (N, C, H)
    x_w = jnp.mean(x, axis=2)                        # (N, C, W)
    y = jnp.concatenate([x_h, x_w], axis=2)          # (N, C, H+W)
    z = jnp.einsum('rc,nct->nrt', w1, y)
    z = (z - m[None, :, None]) / jnp.sqrt(v[None, :, None] + eps) * g[None, :, None] \
        + b[None, :, None]
    z = jnp.maximum(z, 0.0)
    z_h, z_w = z[:, :, :H], z[:, :, H:]
    s_h = jax.nn.sigmoid(jnp.einsum('cr,nrh->nch', wh, z_h))   # (N, C, H)
    s_w = jax.nn.sigmoid(jnp.einsum('cr,nrw->ncw', ww, z_w))   # (N, C, W)
    return x * s_h[:, :, :, None] * s_w[:, :, None, :]


if __name__ == "__main__":
    key = jax.random.PRNGKey(0)
    N, C, H, W = 2, 32, 16, 16
    reduction = 16
    Cr = C // reduction

    ks = jax.random.split(key, 8)
    x = jax.random.normal(ks[0], (N, C, H, W), dtype=jnp.float32)
    # deterministic synthetic parameters (1x1 conv weights stored as (Cout, Cin))
    w1 = 0.2 * jax.random.normal(ks[1], (Cr, C), dtype=jnp.float32)   # conv_1
    wh = 0.2 * jax.random.normal(ks[2], (C, Cr), dtype=jnp.float32)   # F_h
    ww = 0.2 * jax.random.normal(ks[3], (C, Cr), dtype=jnp.float32)   # F_w
    bn_gamma = 1.0 + 0.1 * jax.random.normal(ks[4], (Cr,), dtype=jnp.float32)
    bn_beta = 0.1 * jax.random.normal(ks[5], (Cr,), dtype=jnp.float32)
    bn_mean = 0.05 * jax.random.normal(ks[6], (Cr,), dtype=jnp.float32)
    bn_var = jnp.abs(1.0 + 0.1 * jax.random.normal(ks[7], (Cr,), dtype=jnp.float32))

    ref = ca_block_ref(x, w1, wh, ww, bn_gamma, bn_beta, bn_mean, bn_var)

    # Single-pass (default) path.
    out1 = jax.block_until_ready(
        ca_block(x, w1, wh, ww, bn_gamma, bn_beta, bn_mean, bn_var))
    assert out1.shape == (N, C, H, W)
    # Tolerance accounts for MXU default-precision matmuls (bf16 multiplies, f32 acc).
    assert jnp.allclose(out1, ref, atol=2e-3, rtol=2e-2), \
        float(jnp.max(jnp.abs(out1 - ref)))

    # Two-pass (large-map) path, forced with a small HW tile to exercise it here.
    out2 = jax.block_until_ready(
        ca_block(x, w1, wh, ww, bn_gamma, bn_beta, bn_mean, bn_var,
                 force_two_pass=True, hw_tile=128))
    assert jnp.allclose(out2, ref, atol=2e-3, rtol=2e-2), \
        float(jnp.max(jnp.abs(out2 - ref)))

    print("KERNEL_OK")
</pallas_src>

<mosaic_0001>
module attributes {stable_mosaic.version = 11 : i64} {
  func.func @_ca_block_kernel(%arg0: i32, %arg1: memref<1x32x256xf32, #tpu.memory_space<vmem>>, %arg2: memref<256x32xf32, #tpu.memory_space<vmem>>, %arg3: memref<1x32xf32, #tpu.memory_space<vmem>>, %arg4: memref<2x32xf32, #tpu.memory_space<vmem>>, %arg5: memref<2x1xf32, #tpu.memory_space<vmem>>, %arg6: memref<32x2xf32, #tpu.memory_space<vmem>>, %arg7: memref<32x2xf32, #tpu.memory_space<vmem>>, %arg8: memref<16x256xf32, #tpu.memory_space<vmem>>, %arg9: memref<16x256xf32, #tpu.memory_space<vmem>>, %arg10: memref<1x32x256xf32, #tpu.memory_space<vmem>>) attributes {dimension_semantics = [#tpu.dimension_semantics<parallel>], iteration_bounds = array<i64: 2>, scalar_prefetch = 0 : i64, scratch_operands = 0 : i64, tpu.core_type = #tpu.core_type<tc>, window_params = [{transform_indices = @transform_0, window_bounds = array<i64: 1, 32, 256>}, {pipeline_mode = #tpu.pipeline_mode<synchronous>, transform_indices = @transform_1, window_bounds = array<i64: 256, 32>}, {pipeline_mode = #tpu.pipeline_mode<synchronous>, transform_indices = @transform_2, window_bounds = array<i64: 1, 32>}, {pipeline_mode = #tpu.pipeline_mode<synchronous>, transform_indices = @transform_3, window_bounds = array<i64: 2, 32>}, {pipeline_mode = #tpu.pipeline_mode<synchronous>, transform_indices = @transform_4, window_bounds = array<i64: 2, 1>}, {pipeline_mode = #tpu.pipeline_mode<synchronous>, transform_indices = @transform_5, window_bounds = array<i64: 32, 2>}, {pipeline_mode = #tpu.pipeline_mode<synchronous>, transform_indices = @transform_6, window_bounds = array<i64: 32, 2>}, {pipeline_mode = #tpu.pipeline_mode<synchronous>, transform_indices = @transform_7, window_bounds = array<i64: 16, 256>}, {pipeline_mode = #tpu.pipeline_mode<synchronous>, transform_indices = @transform_8, window_bounds = array<i64: 16, 256>}, {transform_indices = @transform_9, window_bounds = array<i64: 1, 32, 256>}]} {
    %c0 = arith.constant 0 : index
    %c0_0 = arith.constant 0 : index
    %c0_1 = arith.constant 0 : index
    %0 = vector.load %arg1[%c0, %c0_0, %c0_1] : memref<1x32x256xf32, #tpu.memory_space<vmem>>, vector<1x32x256xf32>
    %1 = vector.shape_cast %0 : vector<1x32x256xf32> to vector<32x256xf32>
    %c0_2 = arith.constant 0 : index
    %c0_3 = arith.constant 0 : index
    %2 = vector.load %arg2[%c0_2, %c0_3] : memref<256x32xf32, #tpu.memory_space<vmem>>, vector<256x32xf32>
    %cst = arith.constant dense<0.000000e+00> : vector<32x32xf32>
    %3 = tpu.matmul %1, %2, %cst {dimension_numbers = #tpu.dot_dimension_numbers<[1], [0], [0], [1], [0, 0, 1, 1], [], []>} : vector<32x256xf32>, vector<256x32xf32>, vector<32x32xf32> -> vector<32x32xf32>
    %c0_4 = arith.constant 0 : index
    %c0_5 = arith.constant 0 : index
    %4 = vector.load %arg3[%c0_4, %c0_5] : memref<1x32xf32, #tpu.memory_space<vmem>>, vector<1x32xf32>
    %5 = vector.broadcast %4 : vector<1x32xf32> to vector<32x32xf32>
    %6 = arith.mulf %3, %5 : vector<32x32xf32>
    %c0_6 = arith.constant 0 : index
    %c0_7 = arith.constant 0 : index
    %7 = vector.load %arg4[%c0_6, %c0_7] : memref<2x32xf32, #tpu.memory_space<vmem>>, vector<2x32xf32>
    %cst_8 = arith.constant dense<0.000000e+00> : vector<2x32xf32>
    %8 = tpu.matmul %7, %6, %cst_8 {dimension_numbers = #tpu.dot_dimension_numbers<[1], [0], [0], [1], [0, 0, 1, 1], [], []>} : vector<2x32xf32>, vector<32x32xf32>, vector<2x32xf32> -> vector<2x32xf32>
    %c0_9 = arith.constant 0 : index
    %c0_10 = arith.constant 0 : index
    %9 = vector.load %arg5[%c0_9, %c0_10] : memref<2x1xf32, #tpu.memory_space<vmem>>, vector<2x1xf32>
    %10 = vector.broadcast %9 : vector<2x1xf32> to vector<2x32xf32>
    %11 = arith.addf %8, %10 : vector<2x32xf32>
    %cst_11 = arith.constant 0.000000e+00 : f32
    %12 = vector.broadcast %cst_11 : f32 to vector<2x32xf32>
    %13 = arith.maximumf %11, %12 : vector<2x32xf32>
    %c0_12 = arith.constant 0 : index
    %c0_13 = arith.constant 0 : index
    %14 = vector.load %arg6[%c0_12, %c0_13] : memref<32x2xf32, #tpu.memory_space<vmem>>, vector<32x2xf32>
    %15 = vector.extract_strided_slice %13 {offsets = [0, 0], sizes = [2, 16], strides = [1, 1]} : vector<2x32xf32> to vector<2x16xf32>
    %cst_14 = arith.constant dense<0.000000e+00> : vector<32x16xf32>
    %16 = tpu.matmul %14, %15, %cst_14 {dimension_numbers = #tpu.dot_dimension_numbers<[1], [0], [0], [1], [0, 0, 1, 1], [], []>} : vector<32x2xf32>, vector<2x16xf32>, vector<32x16xf32> -> vector<32x16xf32>
    %17 = arith.negf %16 : vector<32x16xf32>
    %18 = math.exp %17 : vector<32x16xf32>
    %cst_15 = arith.constant 1.000000e+00 : f32
    %19 = vector.broadcast %cst_15 : f32 to vector<32x16xf32>
    %20 = arith.addf %19, %18 : vector<32x16xf32>
    %21 = arith.divf %19, %20 : vector<32x16xf32>
    %c0_16 = arith.constant 0 : index
    %c0_17 = arith.constant 0 : index
    %22 = vector.load %arg7[%c0_16, %c0_17] : memref<32x2xf32, #tpu.memory_space<vmem>>, vector<32x2xf32>
    %23 = vector.extract_strided_slice %13 {offsets = [0, 16], sizes = [2, 16], strides = [1, 1]} : vector<2x32xf32> to vector<2x16xf32>
    %cst_18 = arith.constant dense<0.000000e+00> : vector<32x16xf32>
    %24 = tpu.matmul %22, %23, %cst_18 {dimension_numbers = #tpu.dot_dimension_numbers<[1], [0], [0], [1], [0, 0, 1, 1], [], []>} : vector<32x2xf32>, vector<2x16xf32>, vector<32x16xf32> -> vector<32x16xf32>
    %25 = arith.negf %24 : vector<32x16xf32>
    %26 = math.exp %25 : vector<32x16xf32>
    %cst_19 = arith.constant 1.000000e+00 : f32
    %27 = vector.broadcast %cst_19 : f32 to vector<32x16xf32>
    %28 = arith.addf %27, %26 : vector<32x16xf32>
    %29 = arith.divf %27, %28 : vector<32x16xf32>
    %c0_20 = arith.constant 0 : index
    %c0_21 = arith.constant 0 : index
    %30 = vector.load %arg8[%c0_20, %c0_21] : memref<16x256xf32, #tpu.memory_space<vmem>>, vector<16x256xf32>
    %cst_22 = arith.constant dense<0.000000e+00> : vector<32x256xf32>
    %31 = tpu.matmul %21, %30, %cst_22 {dimension_numbers = #tpu.dot_dimension_numbers<[1], [0], [0], [1], [0, 0, 1, 1], [], []>} : vector<32x16xf32>, vector<16x256xf32>, vector<32x256xf32> -> vector<32x256xf32>
    %c0_23 = arith.constant 0 : index
    %c0_24 = arith.constant 0 : index
    %32 = vector.load %arg9[%c0_23, %c0_24] : memref<16x256xf32, #tpu.memory_space<vmem>>, vector<16x256xf32>
    %cst_25 = arith.constant dense<0.000000e+00> : vector<32x256xf32>
    %33 = tpu.matmul %29, %32, %cst_25 {dimension_numbers = #tpu.dot_dimension_numbers<[1], [0], [0], [1], [0, 0, 1, 1], [], []>} : vector<32x16xf32>, vector<16x256xf32>, vector<32x256xf32> -> vector<32x256xf32>
    %34 = arith.mulf %31, %33 : vector<32x256xf32>
    %35 = arith.mulf %1, %34 : vector<32x256xf32>
    %c0_26 = arith.constant 0 : index
    %c0_27 = arith.constant 0 : index
    %c0_28 = arith.constant 0 : index
    %36 = vector.load %arg10[%c0_26, %c0_27, %c0_28] : memref<1x32x256xf32, #tpu.memory_space<vmem>>, vector<1x32x256xf32>
    %37 = vector.shape_cast %36 : vector<1x32x256xf32> to vector<32x256xf32>
    %38 = vector.shape_cast %35 : vector<32x256xf32> to vector<1x32x256xf32>
    tpu.vector_store %arg10[%c0_26, %c0_27, %c0_28], %38 {strides = array<i32>} : memref<1x32x256xf32, #tpu.memory_space<vmem>>, vector<1x32x256xf32>,
    return
  }
  func.func @transform_0(%arg0: i32) -> (i32, i32, i32) {
    %c0_i32 = arith.constant 0 : i32
    %c0_i32_0 = arith.constant 0 : i32
    %c0_i32_1 = arith.constant 0 : i32
    return %arg0, %c0_i32, %c0_i32_0 : i32, i32, i32
  }
  func.func @transform_1(%arg0: i32) -> (i32, i32) {
    %c0_i32 = arith.constant 0 : i32
    %c0_i32_0 = arith.constant 0 : i32
    %c0_i32_1 = arith.constant 0 : i32
    return %c0_i32, %c0_i32_0 : i32, i32
  }
  func.func @transform_2(%arg0: i32) -> (i32, i32) {
    %c0_i32 = arith.constant 0 : i32
    %c0_i32_0 = arith.constant 0 : i32
    %c0_i32_1 = arith.constant 0 : i32
    return %c0_i32, %c0_i32_0 : i32, i32
  }
  func.func @transform_3(%arg0: i32) -> (i32, i32) {
    %c0_i32 = arith.constant 0 : i32
    %c0_i32_0 = arith.constant 0 : i32
    %c0_i32_1 = arith.constant 0 : i32
    return %c0_i32, %c0_i32_0 : i32, i32
  }
  func.func @transform_4(%arg0: i32) -> (i32, i32) {
    %c0_i32 = arith.constant 0 : i32
    %c0_i32_0 = arith.constant 0 : i32
    %c0_i32_1 = arith.constant 0 : i32
    return %c0_i32, %c0_i32_0 : i32, i32
  }
  func.func @transform_5(%arg0: i32) -> (i32, i32) {
    %c0_i32 = arith.constant 0 : i32
    %c0_i32_0 = arith.constant 0 : i32
    %c0_i32_1 = arith.constant 0 : i32
    return %c0_i32, %c0_i32_0 : i32, i32
  }
  func.func @transform_6(%arg0: i32) -> (i32, i32) {
    %c0_i32 = arith.constant 0 : i32
    %c0_i32_0 = arith.constant 0 : i32
    %c0_i32_1 = arith.constant 0 : i32
    return %c0_i32, %c0_i32_0 : i32, i32
  }
  func.func @transform_7(%arg0: i32) -> (i32, i32) {
    %c0_i32 = arith.constant 0 : i32
    %c0_i32_0 = arith.constant 0 : i32
    %c0_i32_1 = arith.constant 0 : i32
    return %c0_i32, %c0_i32_0 : i32, i32
  }
  func.func @transform_8(%arg0: i32) -> (i32, i32) {
    %c0_i32 = arith.constant 0 : i32
    %c0_i32_0 = arith.constant 0 : i32
    %c0_i32_1 = arith.constant 0 : i32
    return %c0_i32, %c0_i32_0 : i32, i32
  }
  func.func @transform_9(%arg0: i32) -> (i32, i32, i32) {
    %c0_i32 = arith.constant 0 : i32
    %c0_i32_0 = arith.constant 0 : i32
    %c0_i32_1 = arith.constant 0 : i32
    return %arg0, %c0_i32, %c0_i32_0 : i32, i32, i32
  }
}

</mosaic_0001>

<llo_original>
// kernel: tpu_custom_call.1
$region0: #{tpu_custom_call.1}
  #allocation0 [shape = 'u32[]', space=smem, size = 0x4, offset = 0x4, fixed_abs, tag = 'smem constant byte address 0x4 - core index']
  #allocation1 [shape = 'u32[72,128]{1,0:T(1,128)}', space=vmem, size = 0x9000, scoped, tag = 'internal scratch']
  %s0 = inlined_call_operand.vmem [shape: f32[2,32,256], index: 0, kind: input, shape index: {}]
  %s1 = inlined_call_operand.vmem [shape: f32[256,32], index: 1, kind: input, shape index: {}]
  %s2 = inlined_call_operand.vmem [shape: f32[1,32], index: 2, kind: input, shape index: {}]
  %s3 = inlined_call_operand.vmem [shape: f32[2,32], index: 3, kind: input, shape index: {}]
  %s4 = inlined_call_operand.vmem [shape: f32[2,1], index: 4, kind: input, shape index: {}]
  %s5 = inlined_call_operand.vmem [shape: f32[32,2], index: 5, kind: input, shape index: {}]
  %s6 = inlined_call_operand.vmem [shape: f32[32,2], index: 6, kind: input, shape index: {}]
  %s7 = inlined_call_operand.vmem [shape: f32[16,256], index: 7, kind: input, shape index: {}]
  %s8 = inlined_call_operand.vmem [shape: f32[16,256], index: 8, kind: input, shape index: {}]
  %s9 = inlined_call_operand.hbm [shape: f32[2,32,256], index: 9, kind: output, shape index: {}]
  %s10 = sld [smem:[#allocation0]]
  $region69: #{tpu_custom_call.1} parent=0
    _
  %s12 = ssub.s32 1, %s10
  %s13 = scalar_select 0, %s12, %s10
  $region1: #{tpu_custom_call.1} parent=0
    #allocation2 [shape = 'u8[65536]{0}', space=vmem, size = 0x10000, scoped, tag = 'output window, operand 0']
    #allocation3 [shape = 's32[2]{0}', space=sflag, size = 0x8, scoped, tag = 'scoped memory for tpu_custom_call.1']
    %14 = vsyncpa [#allocation3], 0
    %s15 = scalar_lea.sflag [#allocation3], 1
    %16 = vsyncpa %s15, 0
    loop: start=0, step=1, limit=4
    $region2: #{tpu_custom_call.1} parent=1 // loop_pre_header
      _
    $region3: #{tpu_custom_call.1} parent=1 // loop_header
      %s18 = sphi 0, %s22
      %p19 = scmp.ge.s32.totalorder %s18, 4
      %s28 = sphi 0, %s30
      %s31 = sphi 0, %s28
      %s32 = sphi 0, %s31
      %s48 = sphi 0, %s32
      %s52 = sphi 0, %s52
      %s54 = sphi 0, %s52
      %s55 = sphi 0, %s54
      %s69 = sphi 0, %s55
      %s73 = sphi 0, %s73
      %s75 = sphi 0, %s73
      %s76 = sphi 0, %s75
      %s90 = sphi 0, %s76
      %s94 = sphi 0, %s94
      %s96 = sphi 0, %s94
      %s97 = sphi 0, %s96
      %s111 = sphi 0, %s97
      %s115 = sphi 0, %s115
      %s117 = sphi 0, %s115
      %s118 = sphi 0, %s117
      %s132 = sphi 0, %s118
      %s136 = sphi 0, %s136
      %s138 = sphi 0, %s136
      %s139 = sphi 0, %s138
      %s153 = sphi 0, %s139
      %s157 = sphi 0, %s157
      %s159 = sphi 0, %s157
      %s160 = sphi 0, %s159
      %s174 = sphi 0, %s160
      %s178 = sphi 0, %s178
      %s180 = sphi 0, %s178
      %s181 = sphi 0, %s180
      %s195 = sphi 0, %s181
      %s199 = sphi 0, %s199
      %s201 = sphi 0, %s199
      %s202 = sphi 0, %s201
      %s216 = sphi 0, %s202
      %s222 = sphi 0, %s224
      %s225 = sphi 0, %s222
      %s226 = sphi 0, %s225
      %s242 = sphi 0, %s226
    $region4: #{tpu_custom_call.1} parent=1 // loop_header_branch
      %21 = sbr.rel (%p19) target = $region8
    $region5: #{tpu_custom_call.1} parent=1 // loop_body
      %s23 = ssub.s32 %s18, 1
      %s24 = ssub.s32 %s18, 2
      %s25 = sadd.s32 %s18, 1
      %s26 = ssub.s32 %s18, %s25
      %p27 = scmp.eq.s32.totalorder %s26, 0
      %s29 = sadd.s32 %s28, 1
      %s30 = scalar_select %p27, %s28, %s29
      %p33 = pneg %p27
      %p34 = scmp.eq.s32.totalorder %s18, 1
      %p35 = por %p33, %p34
      %p36 = scmp.ne.s32.totalorder %s28, %s31
      %p37 = scmp.eq.s32.totalorder %s18, 0
      %p38 = por %p36, %p37
      %p39 = scmp.ne.s32.totalorder %s28, %s31
      %p40 = scmp.eq.s32.totalorder %s23, 1
      %p41 = por %p39, %p40
      %p42 = scmp.ne.s32.totalorder %s31, %s32
      %p43 = scmp.eq.s32.totalorder %s23, 0
      %p44 = por %p42, %p43
      %p45 = scmp.ne.s32.totalorder %s31, %s32
      %p46 = scmp.eq.s32.totalorder %s24, 1
      %p47 = por %p45, %p46
      %p49 = scmp.ne.s32.totalorder %s32, %s48
      %p50 = scmp.eq.s32.totalorder %s24, 0
      %p51 = por %p49, %p50
      %s53 = sadd.s32 %s52, 1
      %p56 = scmp.eq.s32.totalorder %s18, 1
      %p57 = scmp.ne.s32.totalorder %s52, %s54
      %p58 = scmp.eq.s32.totalorder %s18, 0
      %p59 = por %p57, %p58
      %p60 = scmp.ne.s32.totalorder %s52, %s54
      %p61 = scmp.eq.s32.totalorder %s23, 1
      %p62 = por %p60, %p61
      %p63 = scmp.ne.s32.totalorder %s54, %s55
      %p64 = scmp.eq.s32.totalorder %s23, 0
      %p65 = por %p63, %p64
      %p66 = scmp.ne.s32.totalorder %s54, %s55
      %p67 = scmp.eq.s32.totalorder %s24, 1
      %p68 = por %p66, %p67
      %p70 = scmp.ne.s32.totalorder %s55, %s69
      %p71 = scmp.eq.s32.totalorder %s24, 0
      %p72 = por %p70, %p71
      %s74 = sadd.s32 %s73, 1
      %p77 = scmp.eq.s32.totalorder %s18, 1
      %p78 = scmp.ne.s32.totalorder %s73, %s75
      %p79 = scmp.eq.s32.totalorder %s18, 0
      %p80 = por %p78, %p79
      %p81 = scmp.ne.s32.totalorder %s73, %s75
      %p82 = scmp.eq.s32.totalorder %s23, 1
      %p83 = por %p81, %p82
      %p84 = scmp.ne.s32.totalorder %s75, %s76
      %p85 = scmp.eq.s32.totalorder %s23, 0
      %p86 = por %p84, %p85
      %p87 = scmp.ne.s32.totalorder %s75, %s76
      %p88 = scmp.eq.s32.totalorder %s24, 1
      %p89 = por %p87, %p88
      %p91 = scmp.ne.s32.totalorder %s76, %s90
      %p92 = scmp.eq.s32.totalorder %s24, 0
      %p93 = por %p91, %p92
      %s95 = sadd.s32 %s94, 1
      %p98 = scmp.eq.s32.totalorder %s18, 1
      %p99 = scmp.ne.s32.totalorder %s94, %s96
      %p100 = scmp.eq.s32.totalorder %s18, 0
      %p101 = por %p99, %p100
      %p102 = scmp.ne.s32.totalorder %s94, %s96
      %p103 = scmp.eq.s32.totalorder %s23, 1
      %p104 = por %p102, %p103
      %p105 = scmp.ne.s32.totalorder %s96, %s97
      %p106 = scmp.eq.s32.totalorder %s23, 0
      %p107 = por %p105, %p106
      %p108 = scmp.ne.s32.totalorder %s96, %s97
      %p109 = scmp.eq.s32.totalorder %s24, 1
      %p110 = por %p108, %p109
      %p112 = scmp.ne.s32.totalorder %s97, %s111
      %p113 = scmp.eq.s32.totalorder %s24, 0
      %p114 = por %p112, %p113
      %s116 = sadd.s32 %s115, 1
      %p119 = scmp.eq.s32.totalorder %s18, 1
      %p120 = scmp.ne.s32.totalorder %s115, %s117
      %p121 = scmp.eq.s32.totalorder %s18, 0
      %p122 = por %p120, %p121
      %p123 = scmp.ne.s32.totalorder %s115, %s117
      %p124 = scmp.eq.s32.totalorder %s23, 1
      %p125 = por %p123, %p124
      %p126 = scmp.ne.s32.totalorder %s117, %s118
      %p127 = scmp.eq.s32.totalorder %s23, 0
      %p128 = por %p126, %p127
      %p129 = scmp.ne.s32.totalorder %s117, %s118
      %p130 = scmp.eq.s32.totalorder %s24, 1
      %p131 = por %p129, %p130
      %p133 = scmp.ne.s32.totalorder %s118, %s132
      %p134 = scmp.eq.s32.totalorder %s24, 0
      %p135 = por %p133, %p134
      %s137 = sadd.s32 %s136, 1
      %p140 = scmp.eq.s32.totalorder %s18, 1
      %p141 = scmp.ne.s32.totalorder %s136, %s138
      %p142 = scmp.eq.s32.totalorder %s18, 0
      %p143 = por %p141, %p142
      %p144 = scmp.ne.s32.totalorder %s136, %s138
      %p145 = scmp.eq.s32.totalorder %s23, 1
      %p146 = por %p144, %p145
      %p147 = scmp.ne.s32.totalorder %s138, %s139
      %p148 = scmp.eq.s32.totalorder %s23, 0
      %p149 = por %p147, %p148
      %p150 = scmp.ne.s32.totalorder %s138, %s139
      %p151 = scmp.eq.s32.totalorder %s24, 1
      %p152 = por %p150, %p151
      %p154 = scmp.ne.s32.totalorder %s139, %s153
      %p155 = scmp.eq.s32.totalorder %s24, 0
      %p156 = por %p154, %p155
      %s158 = sadd.s32 %s157, 1
      %p161 = scmp.eq.s32.totalorder %s18, 1
      %p162 = scmp.ne.s32.totalorder %s157, %s159
      %p163 = scmp.eq.s32.totalorder %s18, 0
      %p164 = por %p162, %p163
      %p165 = scmp.ne.s32.totalorder %s157, %s159
      %p166 = scmp.eq.s32.totalorder %s23, 1
      %p167 = por %p165, %p166
      %p168 = scmp.ne.s32.totalorder %s159, %s160
      %p169 = scmp.eq.s32.totalorder %s23, 0
      %p170 = por %p168, %p169
      %p171 = scmp.ne.s32.totalorder %s159, %s160
      %p172 = scmp.eq.s32.totalorder %s24, 1
      %p173 = por %p171, %p172
      %p175 = scmp.ne.s32.totalorder %s160, %s174
      %p176 = scmp.eq.s32.totalorder %s24, 0
      %p177 = por %p175, %p176
      %s179 = sadd.s32 %s178, 1
      %p182 = scmp.eq.s32.totalorder %s18, 1
      %p183 = scmp.ne.s32.totalorder %s178, %s180
      %p184 = scmp.eq.s32.totalorder %s18, 0
      %p185 = por %p183, %p184
      %p186 = scmp.ne.s32.totalorder %s178, %s180
      %p187 = scmp.eq.s32.totalorder %s23, 1
      %p188 = por %p186, %p187
      %p189 = scmp.ne.s32.totalorder %s180, %s181
      %p190 = scmp.eq.s32.totalorder %s23, 0
      %p191 = por %p189, %p190
      %p192 = scmp.ne.s32.totalorder %s180, %s181
      %p193 = scmp.eq.s32.totalorder %s24, 1
      %p194 = por %p192, %p193
      %p196 = scmp.ne.s32.totalorder %s181, %s195
      %p197 = scmp.eq.s32.totalorder %s24, 0
      %p198 = por %p196, %p197
      %s200 = sadd.s32 %s199, 1
      %p203 = scmp.eq.s32.totalorder %s18, 1
      %p204 = scmp.ne.s32.totalorder %s199, %s201
      %p205 = scmp.eq.s32.totalorder %s18, 0
      %p206 = por %p204, %p205
      %p207 = scmp.ne.s32.totalorder %s199, %s201
      %p208 = scmp.eq.s32.totalorder %s23, 1
      %p209 = por %p207, %p208
      %p210 = scmp.ne.s32.totalorder %s201, %s202
      %p211 = scmp.eq.s32.totalorder %s23, 0
      %p212 = por %p210, %p211
      %p213 = scmp.ne.s32.totalorder %s201, %s202
      %p214 = scmp.eq.s32.totalorder %s24, 1
      %p215 = por %p213, %p214
      %p217 = scmp.ne.s32.totalorder %s202, %s216
      %p218 = scmp.eq.s32.totalorder %s24, 0
      %p219 = por %p217, %p218
      %s220 = ssub.s32 %s18, %s25
      %p221 = scmp.eq.s32.totalorder %s220, 0
      %s223 = sadd.s32 %s222, 1
      %s224 = scalar_select %p221, %s222, %s223
      %p227 = pneg %p221
      %p228 = scmp.eq.s32.totalorder %s18, 1
      %p229 = por %p227, %p228
      %p230 = scmp.ne.s32.totalorder %s222, %s225
      %p231 = scmp.eq.s32.totalorder %s18, 0
      %p232 = por %p230, %p231
      %p233 = scmp.ne.s32.totalorder %s222, %s225
      %p234 = scmp.eq.s32.totalorder %s23, 1
      %p235 = por %p233, %p234
      %p236 = scmp.ne.s32.totalorder %s225, %s226
      %p237 = scmp.eq.s32.totalorder %s23, 0
      %p238 = por %p236, %p237
      %p239 = scmp.ne.s32.totalorder %s225, %s226
      %p240 = scmp.eq.s32.totalorder %s24, 1
      %p241 = por %p239, %p240
      %p243 = scmp.ne.s32.totalorder %s226, %s242
      %p244 = scmp.eq.s32.totalorder %s24, 0
      %p245 = por %p243, %p244
      %p246 = scmp.le.s32.totalorder 1, %s18
      %p247 = scmp.lt.s32.totalorder %s18, 3
      %p248 = pnand %p246, %p247
      %p249 = pneg %p248
      // Predicated region
      $region9: #{tpu_custom_call.1} parent=5 // pred_check
        _
      $region10: #{tpu_custom_call.1} parent=5 // pred_check_branch
        %251 = sbr.rel (%p248) target = $region12
      $region11: #{tpu_custom_call.1} parent=5 // pred_region
        %s252 = ssub.s32 %s18, 1
        // Predicated region
        $region13: #{tpu_custom_call.1} parent=11 // pred_check
          %p253 = pneg %p65
        $region14: #{tpu_custom_call.1} parent=11 // pred_check_branch
          %255 = sbr.rel (%p253) target = $region16
        $region15: #{tpu_custom_call.1} parent=11 // pred_region
          _
        $region16: #{tpu_custom_call.1} parent=11 // pred_fallthru
          _
        // Predicated region
        $region17: #{tpu_custom_call.1} parent=11 // pred_check
          %p256 = pneg %p86
        $region18: #{tpu_custom_call.1} parent=11 // pred_check_branch
          %258 = sbr.rel (%p256) target = $region20
        $region19: #{tpu_custom_call.1} parent=11 // pred_region
          _
        $region20: #{tpu_custom_call.1} parent=11 // pred_fallthru
          _
        // Predicated region
        $region21: #{tpu_custom_call.1} parent=11 // pred_check
          %p259 = pneg %p107
        $region22: #{tpu_custom_call.1} parent=11 // pred_check_branch
          %261 = sbr.rel (%p259) target = $region24
        $region23: #{tpu_custom_call.1} parent=11 // pred_region
          _
        $region24: #{tpu_custom_call.1} parent=11 // pred_fallthru
          _
        // Predicated region
        $region25: #{tpu_custom_call.1} parent=11 // pred_check
          %p262 = pneg %p128
        $region26: #{tpu_custom_call.1} parent=11 // pred_check_branch
          %264 = sbr.rel (%p262) target = $region28
        $region27: #{tpu_custom_call.1} parent=11 // pred_region
          _
        $region28: #{tpu_custom_call.1} parent=11 // pred_fallthru
          _
        // Predicated region
        $region29: #{tpu_custom_call.1} parent=11 // pred_check
          %p265 = pneg %p149
        $region30: #{tpu_custom_call.1} parent=11 // pred_check_branch
          %267 = sbr.rel (%p265) target = $region32
        $region31: #{tpu_custom_call.1} parent=11 // pred_region
          _
        $region32: #{tpu_custom_call.1} parent=11 // pred_fallthru
          _
        // Predicated region
        $region33: #{tpu_custom_call.1} parent=11 // pred_check
          %p268 = pneg %p170
        $region34: #{tpu_custom_call.1} parent=11 // pred_check_branch
          %270 = sbr.rel (%p268) target = $region36
        $region35: #{tpu_custom_call.1} parent=11 // pred_region
          _
        $region36: #{tpu_custom_call.1} parent=11 // pred_fallthru
          _
        // Predicated region
        $region37: #{tpu_custom_call.1} parent=11 // pred_check
          %p271 = pneg %p191
        $region38: #{tpu_custom_call.1} parent=11 // pred_check_branch
          %273 = sbr.rel (%p271) target = $region40
        $region39: #{tpu_custom_call.1} parent=11 // pred_region
          _
        $region40: #{tpu_custom_call.1} parent=11 // pred_fallthru
          _
        // Predicated region
        $region41: #{tpu_custom_call.1} parent=11 // pred_check
          %p274 = pneg %p212
        $region42: #{tpu_custom_call.1} parent=11 // pred_check_branch
          %276 = sbr.rel (%p274) target = $region44
        $region43: #{tpu_custom_call.1} parent=11 // pred_region
          _
        $region44: #{tpu_custom_call.1} parent=11 // pred_fallthru
          _
      $region12: #{tpu_custom_call.1} parent=5 // pred_fallthru
        _
      %p277 = scmp.lt.s32.totalorder %s18, 2
      // Predicated region
      $region45: #{tpu_custom_call.1} parent=5 // pred_check
        %p278 = pneg %p277
      $region46: #{tpu_custom_call.1} parent=5 // pred_check_branch
        %280 = sbr.rel (%p278) target = $region48
      $region47: #{tpu_custom_call.1} parent=5 // pred_region
        // Predicated region
        $region49: #{tpu_custom_call.1} parent=47 // pred_check
          %p281 = pneg %p38
        $region50: #{tpu_custom_call.1} parent=47 // pred_check_branch
          %283 = sbr.rel (%p281) target = $region52
        $region51: #{tpu_custom_call.1} parent=47 // pred_region
          %p284 = scmp.lt.s32.totalorder %s18, 1
          %s285 = scalar_select %p284, %s18, 1
          %s286 = smul.addr %s285, 8
          %s287 = smul.addr %s286, 8
          %s288 = scalar_lea.vmem %s0, %s287
        $region52: #{tpu_custom_call.1} parent=47 // pred_fallthru
          _
      $region48: #{tpu_custom_call.1} parent=5 // pred_fallthru
        _
      %p289 = scmp.le.s32.totalorder 1, %s18
      %p290 = scmp.lt.s32.totalorder %s18, 3
      %p291 = pnand %p289, %p290
      %p292 = pneg %p291
      // Predicated region
      $region53: #{tpu_custom_call.1} parent=5 // pred_check
        _
      $region54: #{tpu_custom_call.1} parent=5 // pred_check_branch
        %294 = sbr.rel (%p291) target = $region56
      $region55: #{tpu_custom_call.1} parent=5 // pred_region
        %s295 = ssub.s32 %s18, 1
        %p296 = scmp.lt.s32.totalorder %s23, 1
        %s297 = scalar_select %p296, %s23, 1
        %s298 = smul.addr %s297, 8
        %s299 = smul.addr %s298, 8
        %s300 = scalar_lea.vmem %s0, %s299
        %p301 = pneg %p44
        %p302 = pneg %p41
        %p303 = pneg %p65
        %p304 = pneg %p62
        %p305 = pneg %p86
        %p306 = pneg %p83
        %p307 = pneg %p107
        %p308 = pneg %p104
        %p309 = pneg %p128
        %p310 = pneg %p125
        %p311 = pneg %p149
        %p312 = pneg %p146
        %p313 = pneg %p170
        %p314 = pneg %p167
        %p315 = pneg %p191
        %p316 = pneg %p188
        %p317 = pneg %p212
        %p318 = pneg %p209
        %p319 = pneg %p238
        %p320 = pneg %p235
        %s321 = sand.u32 %s225, 1
        %s322 = scalar_lea.sflag [#allocation3], %s321
        %s323 = sand.u32 %s225, 1
        %s324 = smul.addr %s323, 64
        %s325 = scalar_lea.vmem [#allocation2], %s324
        %p326 = scmp.lt.s32.totalorder %s23, 1
        %s327 = scalar_select %p326, %s23, 1
        %s328 = smul.addr %s327, 8
        %s329 = smul.addr %s328, 8
        %s330 = scalar_lea.vmem %s0, %s329
        %v331 = vld [vmem:[%s330] sm:$0xff]
        %v332 = vld [vmem:[%s330 + $0x8] sm:$0xff]
        %v333 = vld [vmem:[%s330 + $0x10] sm:$0xff]
        %v334 = vld [vmem:[%s330 + $0x18] sm:$0xff]
        %v335 = vld [vmem:[%s330 + $0x20] sm:$0xff]
        %v336 = vld [vmem:[%s330 + $0x28] sm:$0xff]
        %v337 = vld [vmem:[%s330 + $0x30] sm:$0xff]
        %v338 = vld [vmem:[%s330 + $0x38] sm:$0xff]
        %v339 = vld [vmem:[%s1] sm:$0xff]
        %v340 = vld [vmem:[%s1 + $0x8] sm:$0xff]
        %v341 = vld [vmem:[%s1 + $0x10] sm:$0xff]
        %v342 = vld [vmem:[%s1 + $0x18] sm:$0xff]
        %v343 = vld [vmem:[%s1 + $0x20] sm:$0xff]
        %v344 = vld [vmem:[%s1 + $0x28] sm:$0xff]
        %v345 = vld [vmem:[%s1 + $0x30] sm:$0xff]
        %v346 = vld [vmem:[%s1 + $0x38] sm:$0xff]
        %v347 = vld [vmem:[%s1 + $0x40] sm:$0xff]
        %v348 = vld [vmem:[%s1 + $0x48] sm:$0xff]
        %v349 = vld [vmem:[%s1 + $0x50] sm:$0xff]
        %v350 = vld [vmem:[%s1 + $0x58] sm:$0xff]
        %v351 = vld [vmem:[%s1 + $0x60] sm:$0xff]
        %v352 = vld [vmem:[%s1 + $0x68] sm:$0xff]
        %v353 = vld [vmem:[%s1 + $0x70] sm:$0xff]
        %v354 = vld [vmem:[%s1 + $0x78] sm:$0xff]
        %v355 = vld [vmem:[%s1 + $0x80] sm:$0xff]
        %v356 = vld [vmem:[%s1 + $0x88] sm:$0xff]
        %v357 = vld [vmem:[%s1 + $0x90] sm:$0xff]
        %v358 = vld [vmem:[%s1 + $0x98] sm:$0xff]
        %v359 = vld [vmem:[%s1 + $0xa0] sm:$0xff]
        %v360 = vld [vmem:[%s1 + $0xa8] sm:$0xff]
        %v361 = vld [vmem:[%s1 + $0xb0] sm:$0xff]
        %v362 = vld [vmem:[%s1 + $0xb8] sm:$0xff]
        %v363 = vld [vmem:[%s1 + $0xc0] sm:$0xff]
        %v364 = vld [vmem:[%s1 + $0xc8] sm:$0xff]
        %v365 = vld [vmem:[%s1 + $0xd0] sm:$0xff]
        %v366 = vld [vmem:[%s1 + $0xd8] sm:$0xff]
        %v367 = vld [vmem:[%s1 + $0xe0] sm:$0xff]
        %v368 = vld [vmem:[%s1 + $0xe8] sm:$0xff]
        %v369 = vld [vmem:[%s1 + $0xf0] sm:$0xff]
        %v370 = vld [vmem:[%s1 + $0xf8] sm:$0xff]
        %371 = vmatpush.msra.mxu0 %v354
        %372 = vmatpush.msra.mxu0 %v353
        %373 = vmatpush.msra.mxu0 %v352
        %374 = vmatpush.msra.mxu0 %v351
        %375 = vmatpush.msra.mxu0 %v350
        %376 = vmatpush.msra.mxu0 %v349
        %377 = vmatpush.msra.mxu0 %v348
        %378 = vmatpush.msra.mxu0 %v347
        %379 = vmatpush.msra.mxu0 %v346
        %380 = vmatpush.msra.mxu0 %v345
        %381 = vmatpush.msra.mxu0 %v344
        %382 = vmatpush.msra.mxu0 %v343
        %383 = vmatpush.msra.mxu0 %v342
        %384 = vmatpush.msra.mxu0 %v341
        %385 = vmatpush.msra.mxu0 %v340
        %386 = vmatpush.msra.mxu0 %v339
        %387 = vmatmul.f32.gmra.mxu0 %v331
        %v388 = vpop.f32.mrf.mxu0
        %v389 = vadd.f32 0.0, %v388
        %390 = vmatmul.f32.gmra.mxu0 %v333
        %v391 = vpop.f32.mrf.mxu0
        %v392 = vadd.f32 0.0, %v391
        %393 = vmatmul.f32.gmra.mxu0 %v335
        %v394 = vpop.f32.mrf.mxu0
        %v395 = vadd.f32 0.0, %v394
        %396 = vmatmul.f32.gmra.mxu0 %v337
        %v397 = vpop.f32.mrf.mxu0
        %v398 = vadd.f32 0.0, %v397
        %399 = vdwg.mxu0
        %400 = vmatpush.msra.mxu0 %v370
        %401 = vmatpush.msra.mxu0 %v369
        %402 = vmatpush.msra.mxu0 %v368
        %403 = vmatpush.msra.mxu0 %v367
        %404 = vmatpush.msra.mxu0 %v366
        %405 = vmatpush.msra.mxu0 %v365
        %406 = vmatpush.msra.mxu0 %v364
        %407 = vmatpush.msra.mxu0 %v363
        %408 = vmatpush.msra.mxu0 %v362
        %409 = vmatpush.msra.mxu0 %v361
        %410 = vmatpush.msra.mxu0 %v360
        %411 = vmatpush.msra.mxu0 %v359
        %412 = vmatpush.msra.mxu0 %v358
        %413 = vmatpush.msra.mxu0 %v357
        %414 = vmatpush.msra.mxu0 %v356
        %415 = vmatpush.msra.mxu0 %v355
        %416 = vmatmul.f32.gmra.mxu0 %v332
        %v417 = vpop.f32.mrf.mxu0
        %v418 = vadd.f32 %v389, %v417
        %419 = vmatmul.f32.gmra.mxu0 %v334
        %v420 = vpop.f32.mrf.mxu0
        %v421 = vadd.f32 %v392, %v420
        %422 = vmatmul.f32.gmra.mxu0 %v336
        %v423 = vpop.f32.mrf.mxu0
        %v424 = vadd.f32 %v395, %v423
        %425 = vmatmul.f32.gmra.mxu0 %v338
        %v426 = vpop.f32.mrf.mxu0
        %v427 = vadd.f32 %v398, %v426
        %428 = vdwg.mxu0
        %v429 = vld [vmem:[%s2] sm:$0x1]
        %v431 = vperm.slane %v429, 0
        %v433 = vmul.f32 %v418, %v431
        %v434 = vmul.f32 %v421, %v431
        %v435 = vmul.f32 %v424, %v431
        %v436 = vmul.f32 %v427, %v431
        %v437 = vld [vmem:[%s3] sm:$0x3]
        %v438 = vld [vmem:[%s4] sm:$0x3]
        %440 = vset.pattern.permute.xlu0 0
        %441 = vperm.xlu0 %440, %v438
        %v442 = vpop.permute.xlu0 %441
        %vm444 = vcmask 261120
        %v446 = vsel %vm444, %v437, 0
        %448 = vmatpush.msra.mxu0 0.0
        %449 = vmatpush.msra.mxu0 0.0
        %450 = vmatpush.msra.mxu0 0.0
        %451 = vmatpush.msra.mxu0 0.0
        %452 = vmatpush.msra.mxu0 0.0
        %453 = vmatpush.msra.mxu0 0.0
        %454 = vmatpush.msra.mxu0 0.0
        %455 = vmatpush.msra.mxu0 0.0
        %456 = vmatpush.msra.mxu0 0.0
        %457 = vmatpush.msra.mxu0 0.0
        %458 = vmatpush.msra.mxu0 0.0
        %459 = vmatpush.msra.mxu0 0.0
        %460 = vmatpush.msra.mxu0 %v436
        %461 = vmatpush.msra.mxu0 %v435
        %462 = vmatpush.msra.mxu0 %v434
        %463 = vmatpush.msra.mxu0 %v433
        %464 = vmatmul.f32.gmra.mxu0 %v446
        %v465 = vpop.f32.mrf.mxu0
        %v466 = vadd.f32 %v442, %v465
        %467 = vdwg.mxu0
        %v468 = vmax.f32 %v466, 0.0
        %v469 = vld [vmem:[%s5] sm:$0xff]
        %v470 = vld [vmem:[%s5 + $0x8] sm:$0xff]
        %v471 = vld [vmem:[%s5 + $0x10] sm:$0xff]
        %v472 = vld [vmem:[%s5 + $0x18] sm:$0xff]
        %vm473 = vcmask 15360
        %v475 = vsel %vm473, %v469, 0
        %v478 = vsel %vm473, %v470, 0
        %v481 = vsel %vm473, %v471, 0
        %v484 = vsel %vm473, %v472, 0
        %vm486 = vcmask 1041408
        %v488 = vsel %vm486, %v468, 0
        %490 = vmatpush.msra.mxu0 0.0
        %491 = vmatpush.msra.mxu0 0.0
        %492 = vmatpush.msra.mxu0 0.0
        %493 = vmatpush.msra.mxu0 0.0
        %494 = vmatpush.msra.mxu0 0.0
        %495 = vmatpush.msra.mxu0 0.0
        %496 = vmatpush.msra.mxu0 0.0
        %497 = vmatpush.msra.mxu0 0.0
        %498 = vmatpush.msra.mxu0 0.0
        %499 = vmatpush.msra.mxu0 0.0
        %500 = vmatpush.msra.mxu0 0.0
        %501 = vmatpush.msra.mxu0 0.0
        %502 = vmatpush.msra.mxu0 0.0
        %503 = vmatpush.msra.mxu0 0.0
        %504 = vmatpush.msra.mxu0 0.0
        %505 = vmatpush.msra.mxu0 %v488
        %506 = vmatmul.f32.gmra.mxu0 %v475
        %v507 = vpop.f32.mrf.mxu0
        %v508 = vadd.f32 0.0, %v507
        %509 = vmatmul.f32.gmra.mxu0 %v478
        %v510 = vpop.f32.mrf.mxu0
        %v511 = vadd.f32 0.0, %v510
        %512 = vmatmul.f32.gmra.mxu0 %v481
        %v513 = vpop.f32.mrf.mxu0
        %v514 = vadd.f32 0.0, %v513
        %515 = vmatmul.f32.gmra.mxu0 %v484
        %v516 = vpop.f32.mrf.mxu0
        %v517 = vadd.f32 0.0, %v516
        %518 = vdwg.mxu0
        %v519 = vxor.u32 %v508, 2147483648
        %v520 = vxor.u32 %v511, 2147483648
        %v521 = vxor.u32 %v514, 2147483648
        %v522 = vxor.u32 %v517, 2147483648
        %v523 = vmul.f32 %v519, 1.442695
        %v524 = vpow.pop %v523
        %v525 = vmul.f32 %v520, 1.442695
        %v526 = vpow.pop %v525
        %v527 = vmul.f32 %v521, 1.442695
        %v528 = vpow.pop %v527
        %v529 = vmul.f32 %v522, 1.442695
        %v530 = vpow.pop %v529
        %v531 = vadd.f32 %v524, 1.0
        %v532 = vadd.f32 %v526, 1.0
        %v533 = vadd.f32 %v528, 1.0
        %v534 = vadd.f32 %v530, 1.0
        %v535 = vrcp.pop %v531
        %v536 = vmul.f32 %v531, %v535
        %v537 = vsub.f32 1.0, %v536
        %v538 = vmul.f32 %v535, %v537
        %v539 = vadd.f32 %v535, %v538
        %vm540 = vweird.f32 %v531
        %vm541 = vweird.f32 %v535
        %vm542 = vmor %vm540, %vm541
        %v543 = vsel %vm542, %v535, %v539
        %v544 = vand.u32 2147483647, %v531
        %vm545 = vcmp.eq.f32.partialorder %v544, 8.507059e+37
        %v546 = vand.u32 %v531, 2147483648
        %v547 = vor.u32 1.1754944e-38, %v546
        %v548 = vsel %vm545, %v547, %v543
        %v549 = vmul.f32 1.0, %v548
        %v550 = vrcp.pop %v532
        %v551 = vmul.f32 %v532, %v550
        %v552 = vsub.f32 1.0, %v551
        %v553 = vmul.f32 %v550, %v552
        %v554 = vadd.f32 %v550, %v553
        %vm555 = vweird.f32 %v532
        %vm556 = vweird.f32 %v550
        %vm557 = vmor %vm555, %vm556
        %v558 = vsel %vm557, %v550, %v554
        %v559 = vand.u32 2147483647, %v532
        %vm560 = vcmp.eq.f32.partialorder %v559, 8.507059e+37
        %v561 = vand.u32 %v532, 2147483648
        %v562 = vor.u32 1.1754944e-38, %v561
        %v563 = vsel %vm560, %v562, %v558
        %v564 = vmul.f32 1.0, %v563
        %v565 = vrcp.pop %v533
        %v566 = vmul.f32 %v533, %v565
        %v567 = vsub.f32 1.0, %v566
        %v568 = vmul.f32 %v565, %v567
        %v569 = vadd.f32 %v565, %v568
        %vm570 = vweird.f32 %v533
        %vm571 = vweird.f32 %v565
        %vm572 = vmor %vm570, %vm571
        %v573 = vsel %vm572, %v565, %v569
        %v574 = vand.u32 2147483647, %v533
        %vm575 = vcmp.eq.f32.partialorder %v574, 8.507059e+37
        %v576 = vand.u32 %v533, 2147483648
        %v577 = vor.u32 1.1754944e-38, %v576
        %v578 = vsel %vm575, %v577, %v573
        %v579 = vmul.f32 1.0, %v578
        %v580 = vrcp.pop %v534
        %v581 = vmul.f32 %v534, %v580
        %v582 = vsub.f32 1.0, %v581
        %v583 = vmul.f32 %v580, %v582
        %v584 = vadd.f32 %v580, %v583
        %vm585 = vweird.f32 %v534
        %vm586 = vweird.f32 %v580
        %vm587 = vmor %vm585, %vm586
        %v588 = vsel %vm587, %v580, %v584
        %v589 = vand.u32 2147483647, %v534
        %vm590 = vcmp.eq.f32.partialorder %v589, 8.507059e+37
        %v591 = vand.u32 %v534, 2147483648
        %v592 = vor.u32 1.1754944e-38, %v591
        %v593 = vsel %vm590, %v592, %v588
        %v594 = vmul.f32 1.0, %v593
        %v595 = vld [vmem:[%s6] sm:$0xff]
        %v596 = vld [vmem:[%s6 + $0x8] sm:$0xff]
        %v597 = vld [vmem:[%s6 + $0x10] sm:$0xff]
        %v598 = vld [vmem:[%s6 + $0x18] sm:$0xff]
        %599 = vrot.lane.b32.xlu0 %v468, 112
        %v600 = vpop.permute.xlu0 %599
        %v602 = vsel %vm473, %v595, 0
        %v605 = vsel %vm473, %v596, 0
        %v608 = vsel %vm473, %v597, 0
        %v611 = vsel %vm473, %v598, 0
        %v613 = vsel %vm486, %v600, 0
        %615 = vmatpush.msra.mxu0 0.0
        %616 = vmatpush.msra.mxu0 0.0
        %617 = vmatpush.msra.mxu0 0.0
        %618 = vmatpush.msra.mxu0 0.0
        %619 = vmatpush.msra.mxu0 0.0
        %620 = vmatpush.msra.mxu0 0.0
        %621 = vmatpush.msra.mxu0 0.0
        %622 = vmatpush.msra.mxu0 0.0
        %623 = vmatpush.msra.mxu0 0.0
        %624 = vmatpush.msra.mxu0 0.0
        %625 = vmatpush.msra.mxu0 0.0
        %626 = vmatpush.msra.mxu0 0.0
        %627 = vmatpush.msra.mxu0 0.0
        %628 = vmatpush.msra.mxu0 0.0
        %629 = vmatpush.msra.mxu0 0.0
        %630 = vmatpush.msra.mxu0 %v613
        %631 = vmatmul.f32.gmra.mxu0 %v602
        %v632 = vpop.f32.mrf.mxu0
        %v633 = vadd.f32 0.0, %v632
        %634 = vmatmul.f32.gmra.mxu0 %v605
        %v635 = vpop.f32.mrf.mxu0
        %v636 = vadd.f32 0.0, %v635
        %637 = vmatmul.f32.gmra.mxu0 %v608
        %v638 = vpop.f32.mrf.mxu0
        %v639 = vadd.f32 0.0, %v638
        %640 = vmatmul.f32.gmra.mxu0 %v611
        %v641 = vpop.f32.mrf.mxu0
        %v642 = vadd.f32 0.0, %v641
        %643 = vdwg.mxu0
        %v644 = vxor.u32 %v633, 2147483648
        %v645 = vxor.u32 %v636, 2147483648
        %v646 = vxor.u32 %v639, 2147483648
        %v647 = vxor.u32 %v642, 2147483648
        %v648 = vmul.f32 %v644, 1.442695
        %v649 = vpow.pop %v648
        %v650 = vmul.f32 %v645, 1.442695
        %v651 = vpow.pop %v650
        %v652 = vmul.f32 %v646, 1.442695
        %v653 = vpow.pop %v652
        %v654 = vmul.f32 %v647, 1.442695
        %v655 = vpow.pop %v654
        %v656 = vadd.f32 %v649, 1.0
        %v657 = vadd.f32 %v651, 1.0
        %v658 = vadd.f32 %v653, 1.0
        %v659 = vadd.f32 %v655, 1.0
        %v660 = vrcp.pop %v656
        %v661 = vmul.f32 %v656, %v660
        %v662 = vsub.f32 1.0, %v661
        %v663 = vmul.f32 %v660, %v662
        %v664 = vadd.f32 %v660, %v663
        %vm665 = vweird.f32 %v656
        %vm666 = vweird.f32 %v660
        %vm667 = vmor %vm665, %vm666
        %v668 = vsel %vm667, %v660, %v664
        %v669 = vand.u32 2147483647, %v656
        %vm670 = vcmp.eq.f32.partialorder %v669, 8.507059e+37
        %v671 = vand.u32 %v656, 2147483648
        %v672 = vor.u32 1.1754944e-38, %v671
        %v673 = vsel %vm670, %v672, %v668
        %v674 = vmul.f32 1.0, %v673
        %v675 = vrcp.pop %v657
        %v676 = vmul.f32 %v657, %v675
        %v677 = vsub.f32 1.0, %v676
        %v678 = vmul.f32 %v675, %v677
        %v679 = vadd.f32 %v675, %v678
        %vm680 = vweird.f32 %v657
        %vm681 = vweird.f32 %v675
        %vm682 = vmor %vm680, %vm681
        %v683 = vsel %vm682, %v675, %v679
        %v684 = vand.u32 2147483647, %v657
        %vm685 = vcmp.eq.f32.partialorder %v684, 8.507059e+37
        %v686 = vand.u32 %v657, 2147483648
        %v687 = vor.u32 1.1754944e-38, %v686
        %v688 = vsel %vm685, %v687, %v683
        %v689 = vmul.f32 1.0, %v688
        %v690 = vrcp.pop %v658
        %v691 = vmul.f32 %v658, %v690
        %v692 = vsub.f32 1.0, %v691
        %v693 = vmul.f32 %v690, %v692
        %v694 = vadd.f32 %v690, %v693
        %vm695 = vweird.f32 %v658
        %vm696 = vweird.f32 %v690
        %vm697 = vmor %vm695, %vm696
        %v698 = vsel %vm697, %v690, %v694
        %v699 = vand.u32 2147483647, %v658
        %vm700 = vcmp.eq.f32.partialorder %v699, 8.507059e+37
        %v701 = vand.u32 %v658, 2147483648
        %v702 = vor.u32 1.1754944e-38, %v701
        %v703 = vsel %vm700, %v702, %v698
        %v704 = vmul.f32 1.0, %v703
        %v705 = vrcp.pop %v659
        %v706 = vmul.f32 %v659, %v705
        %v707 = vsub.f32 1.0, %v706
        %v708 = vmul.f32 %v705, %v707
        %v709 = vadd.f32 %v705, %v708
        %vm710 = vweird.f32 %v659
        %vm711 = vweird.f32 %v705
        %vm712 = vmor %vm710, %vm711
        %v713 = vsel %vm712, %v705, %v709
        %v714 = vand.u32 2147483647, %v659
        %vm715 = vcmp.eq.f32.partialorder %v714, 8.507059e+37
        %v716 = vand.u32 %v659, 2147483648
        %v717 = vor.u32 1.1754944e-38, %v716
        %v718 = vsel %vm715, %v717, %v713
        %v719 = vmul.f32 1.0, %v718
        %v720 = vld [vmem:[%s7] sm:$0xff]
        %v721 = vld [vmem:[%s7 + $0x8] sm:$0xff]
        %v722 = vld [vmem:[%s7 + $0x10] sm:$0xff]
        %v723 = vld [vmem:[%s7 + $0x18] sm:$0xff]
        %vm724 = vcmask 130048
        %v726 = vsel %vm724, %v549, 0
        %v729 = vsel %vm724, %v564, 0
        %v732 = vsel %vm724, %v579, 0
        %v735 = vsel %vm724, %v594, 0
        %737 = vmatpush.msra.mxu0 0.0
        %738 = vmatpush.msra.mxu0 0.0
        %739 = vmatpush.msra.mxu0 0.0
        %740 = vmatpush.msra.mxu0 0.0
        %741 = vmatpush.msra.mxu0 0.0
        %742 = vmatpush.msra.mxu0 0.0
        %743 = vmatpush.msra.mxu0 0.0
        %744 = vmatpush.msra.mxu0 0.0
        %745 = vmatpush.msra.mxu0 0.0
        %746 = vmatpush.msra.mxu0 0.0
        %747 = vmatpush.msra.mxu0 0.0
        %748 = vmatpush.msra.mxu0 0.0
        %749 = vmatpush.msra.mxu0 0.0
        %750 = vmatpush.msra.mxu0 0.0
        %751 = vmatpush.msra.mxu0 %v722
        %752 = vmatpush.msra.mxu0 %v720
        %753 = vmatmul.f32.gmra.mxu0 %v726
        %v754 = vpop.f32.mrf.mxu0
        %v755 = vadd.f32 0.0, %v754
        %756 = vmatmul.f32.gmra.mxu0 %v729
        %v757 = vpop.f32.mrf.mxu0
        %v758 = vadd.f32 0.0, %v757
        %759 = vmatmul.f32.gmra.mxu0 %v732
        %v760 = vpop.f32.mrf.mxu0
        %v761 = vadd.f32 0.0, %v760
        %762 = vmatmul.f32.gmra.mxu0 %v735
        %v763 = vpop.f32.mrf.mxu0
        %v764 = vadd.f32 0.0, %v763
        %765 = vdwg.mxu0
        %766 = vmatpush.msra.mxu0 0.0
        %767 = vmatpush.msra.mxu0 0.0
        %768 = vmatpush.msra.mxu0 0.0
        %769 = vmatpush.msra.mxu0 0.0
        %770 = vmatpush.msra.mxu0 0.0
        %771 = vmatpush.msra.mxu0 0.0
        %772 = vmatpush.msra.mxu0 0.0
        %773 = vmatpush.msra.mxu0 0.0
        %774 = vmatpush.msra.mxu0 0.0
        %775 = vmatpush.msra.mxu0 0.0
        %776 = vmatpush.msra.mxu0 0.0
        %777 = vmatpush.msra.mxu0 0.0
        %778 = vmatpush.msra.mxu0 0.0
        %779 = vmatpush.msra.mxu0 0.0
        %780 = vmatpush.msra.mxu0 %v723
        %781 = vmatpush.msra.mxu0 %v721
        %782 = vmatmul.f32.gmra.mxu0 %v726
        %v783 = vpop.f32.mrf.mxu0
        %v784 = vadd.f32 0.0, %v783
        %785 = vmatmul.f32.gmra.mxu0 %v729
        %v786 = vpop.f32.mrf.mxu0
        %v787 = vadd.f32 0.0, %v786
        %788 = vmatmul.f32.gmra.mxu0 %v732
        %v789 = vpop.f32.mrf.mxu0
        %v790 = vadd.f32 0.0, %v789
        %791 = vmatmul.f32.gmra.mxu0 %v735
        %v792 = vpop.f32.mrf.mxu0
        %v793 = vadd.f32 0.0, %v792
        %794 = vdwg.mxu0
        %v795 = vld [vmem:[%s8] sm:$0xff]
        %v796 = vld [vmem:[%s8 + $0x8] sm:$0xff]
        %v797 = vld [vmem:[%s8 + $0x10] sm:$0xff]
        %v798 = vld [vmem:[%s8 + $0x18] sm:$0xff]
        %v800 = vsel %vm724, %v674, 0
        %v803 = vsel %vm724, %v689, 0
        %v806 = vsel %vm724, %v704, 0
        %v809 = vsel %vm724, %v719, 0
        %811 = vmatpush.msra.mxu0 0.0
        %812 = vmatpush.msra.mxu0 0.0
        %813 = vmatpush.msra.mxu0 0.0
        %814 = vmatpush.msra.mxu0 0.0
        %815 = vmatpush.msra.mxu0 0.0
        %816 = vmatpush.msra.mxu0 0.0
        %817 = vmatpush.msra.mxu0 0.0
        %818 = vmatpush.msra.mxu0 0.0
        %819 = vmatpush.msra.mxu0 0.0
        %820 = vmatpush.msra.mxu0 0.0
        %821 = vmatpush.msra.mxu0 0.0
        %822 = vmatpush.msra.mxu0 0.0
        %823 = vmatpush.msra.mxu0 0.0
        %824 = vmatpush.msra.mxu0 0.0
        %825 = vmatpush.msra.mxu0 %v797
        %826 = vmatpush.msra.mxu0 %v795
        %827 = vmatmul.f32.gmra.mxu0 %v800
        %v828 = vpop.f32.mrf.mxu0
        %v829 = vadd.f32 0.0, %v828
        %830 = vmatmul.f32.gmra.mxu0 %v803
        %v831 = vpop.f32.mrf.mxu0
        %v832 = vadd.f32 0.0, %v831
        %833 = vmatmul.f32.gmra.mxu0 %v806
        %v834 = vpop.f32.mrf.mxu0
        %v835 = vadd.f32 0.0, %v834
        %836 = vmatmul.f32.gmra.mxu0 %v809
        %v837 = vpop.f32.mrf.mxu0
        %v838 = vadd.f32 0.0, %v837
        %839 = vdwg.mxu0
        %840 = vmatpush.msra.mxu0 0.0
        %841 = vmatpush.msra.mxu0 0.0
        %842 = vmatpush.msra.mxu0 0.0
        %843 = vmatpush.msra.mxu0 0.0
        %844 = vmatpush.msra.mxu0 0.0
        %845 = vmatpush.msra.mxu0 0.0
        %846 = vmatpush.msra.mxu0 0.0
        %847 = vmatpush.msra.mxu0 0.0
        %848 = vmatpush.msra.mxu0 0.0
        %849 = vmatpush.msra.mxu0 0.0
        %850 = vmatpush.msra.mxu0 0.0
        %851 = vmatpush.msra.mxu0 0.0
        %852 = vmatpush.msra.mxu0 0.0
        %853 = vmatpush.msra.mxu0 0.0
        %854 = vmatpush.msra.mxu0 %v798
        %855 = vmatpush.msra.mxu0 %v796
        %856 = vmatmul.f32.gmra.mxu0 %v800
        %v857 = vpop.f32.mrf.mxu0
        %v858 = vadd.f32 0.0, %v857
        %859 = vmatmul.f32.gmra.mxu0 %v803
        %v860 = vpop.f32.mrf.mxu0
        %v861 = vadd.f32 0.0, %v860
        %862 = vmatmul.f32.gmra.mxu0 %v806
        %v863 = vpop.f32.mrf.mxu0
        %v864 = vadd.f32 0.0, %v863
        %865 = vmatmul.f32.gmra.mxu0 %v809
        %v866 = vpop.f32.mrf.mxu0
        %v867 = vadd.f32 0.0, %v866
        %868 = vdwg.mxu0
        %v869 = vmul.f32 %v755, %v829
        %v870 = vmul.f32 %v784, %v858
        %v871 = vmul.f32 %v758, %v832
        %v872 = vmul.f32 %v787, %v861
        %v873 = vmul.f32 %v761, %v835
        %v874 = vmul.f32 %v790, %v864
        %v875 = vmul.f32 %v764, %v838
        %v876 = vmul.f32 %v793, %v867
        %v877 = vmul.f32 %v331, %v869
        %v878 = vmul.f32 %v332, %v870
        %v879 = vmul.f32 %v333, %v871
        %v880 = vmul.f32 %v334, %v872
        %v881 = vmul.f32 %v335, %v873
        %v882 = vmul.f32 %v336, %v874
        %v883 = vmul.f32 %v337, %v875
        %v884 = vmul.f32 %v338, %v876
        %885 = vst [vmem:[%s325] sm:$0xff] %v877
        %886 = vst [vmem:[%s325 + $0x8] sm:$0xff] %v878
        %887 = vst [vmem:[%s325 + $0x10] sm:$0xff] %v879
        %888 = vst [vmem:[%s325 + $0x18] sm:$0xff] %v880
        %889 = vst [vmem:[%s325 + $0x20] sm:$0xff] %v881
        %890 = vst [vmem:[%s325 + $0x28] sm:$0xff] %v882
        %891 = vst [vmem:[%s325 + $0x30] sm:$0xff] %v883
        %892 = vst [vmem:[%s325 + $0x38] sm:$0xff] %v884
        %s893 = sand.u32 %s225, 1
        %s894 = scalar_lea.sflag [#allocation3], %s893
        %s895 = sand.u32 %s225, 1
        %s896 = smul.addr %s895, 64
        %s897 = scalar_lea.vmem [#allocation2], %s896
        // Predicated region
        $region57: #{tpu_custom_call.1} parent=55 // pred_check
          %p898 = pneg %p235
        $region58: #{tpu_custom_call.1} parent=55 // pred_check_branch
          %900 = sbr.rel (%p898) target = $region60
        $region59: #{tpu_custom_call.1} parent=55 // pred_region
          %902 = vsyncadd %s894, 0
          %s903 = smul.addr %s23, 8
          %s904 = smul.addr %s903, 8
          %s905 = scalar_lea.hbm %s9, %s904
          %s906 = sshll.u32 %s897, 4
          %s907 = int_to_ptr.vmem [resolvable:$true] %s906
          %s908 = sshll.u32 %s905, 4
          %s909 = int_to_ptr.hbm [resolvable:$true] %s908
          %914 = dma.vmem_to_hbm [thread:$0]  %s907, 1024, %s909, %s894, 256, 256, 16
        $region60: #{tpu_custom_call.1} parent=55 // pred_fallthru
          _
      $region56: #{tpu_custom_call.1} parent=5 // pred_fallthru
        _
      %p915 = scmp.le.s32.totalorder 2, %s18
      // Predicated region
      $region61: #{tpu_custom_call.1} parent=5 // pred_check
        %p916 = pneg %p915
      $region62: #{tpu_custom_call.1} parent=5 // pred_check_branch
        %918 = sbr.rel (%p916) target = $region64
      $region63: #{tpu_custom_call.1} parent=5 // pred_region
        %s919 = ssub.s32 %s18, 2
        // Predicated region
        $region65: #{tpu_custom_call.1} parent=63 // pred_check
          %p920 = pneg %p241
        $region66: #{tpu_custom_call.1} parent=63 // pred_check_branch
          %922 = sbr.rel (%p920) target = $region68
        $region67: #{tpu_custom_call.1} parent=63 // pred_region
          %s923 = sand.u32 %s226, 1
          %s924 = scalar_lea.sflag [#allocation3], %s923
          %s925 = sand.u32 %s226, 1
          %s926 = smul.addr %s925, 64
          %s927 = scalar_lea.vmem [#allocation2], %s926
          %929 = dma.done %s924, 1024
        $region68: #{tpu_custom_call.1} parent=63 // pred_fallthru
          _
      $region64: #{tpu_custom_call.1} parent=5 // pred_fallthru
        _
    $region6: #{tpu_custom_call.1} parent=1 // loop_footer
      %s22 = sadd.s32 1, %s18
    $region7: #{tpu_custom_call.1} parent=1 // loop_footer_branch
      %17 = sbr.rel target = $region3
    $region8: #{tpu_custom_call.1} parent=1 // loop_exit
      _
    %930 = vsyncpa [#allocation3], 1
    %s931 = scalar_lea.sflag [#allocation3], 1
    %932 = vsyncpa %s931, 1

</llo_original>
